<compile_context>
chip_gen: v6e
topology: v6e:2x2x1
jax: 0.10.0
libtpu: 0.0.40
codegen_flags: <defaults>
</compile_context>

<pallas_src>
import jax
import jax.numpy as jnp
from jax.experimental import pallas as pl
from jax.experimental.pallas import tpu as pltpu


def _round_up(x, m):
    return (x + m - 1) // m * m


def cbc_kernel(x0_ref, waug_ref, b1_ref, w2h_ref, b2_ref, w3h_ref, b3_ref,
               out_ref):
    f32 = jnp.float32
    mat = waug_ref.dtype
    H1p = b1_ref.shape[1]
    H2p = b2_ref.shape[1]
    Do = out_ref.shape[1]

    # Layer 1 + both conditioning projections in ONE matmul (3 MXU pushes
    # total per tile):  y = [ x0@W1 | c@W2c | c@W3c ].
    x0 = x0_ref[...].astype(mat)        # in-kernel VPU cast, hidden under MXU/DMA
    y = jnp.dot(x0, waug_ref[...], preferred_element_type=f32)

    h1 = jnp.maximum(y[:, :H1p] + b1_ref[...], 0.0)

    h2 = jnp.dot(h1.astype(mat), w2h_ref[...], preferred_element_type=f32)
    h2 = jnp.maximum(h2 + y[:, H1p:H1p + H2p] + b2_ref[...], 0.0)

    out = jnp.dot(h2.astype(mat), w3h_ref[...], preferred_element_type=f32)
    out = out + y[:, H1p + H2p:] + b3_ref[...]

    # Unpadded store: only the Do real lanes go to HBM (16x less writeback
    # than a 128-lane f32 padded store for Do=8). Block width equals the full
    # array width, so the HBM destination of each tile is contiguous.
    out_ref[...] = out[:, :Do].astype(out_ref.dtype)


def _prep_weights(params, dim_input, dim_conditioning, mat_dtype):
    """Pad/fuse weights once. Cheap (<0.5 MB); hoist if params are static."""
    W1, b1 = params["W1"], params["b1"]
    W2, b2 = params["W2"], params["b2"]
    W3, b3 = params["W3"], params["b3"]
    H1, H2, Do = W1.shape[1], W2.shape[1], W3.shape[1]
    assert W1.shape[0] == dim_input + dim_conditioning, "W1 fan-in mismatch"
    assert W2.shape[0] == H1 + dim_conditioning, "W2 fan-in mismatch"
    assert W3.shape[0] == H2 + dim_conditioning, "W3 fan-in mismatch"

    # Lane-align hidden/compute widths (no-op for default 256/256) so every
    # in-kernel slice lands on a 128-lane boundary.
    H1p = _round_up(H1, 128)
    H2p = _round_up(H2, 128)
    Dp = _round_up(Do, 128)     # layer-3 *compute* width; store stays Do wide

    W1p = jnp.pad(W1, ((0, 0), (0, H1p - H1)))
    b1p = jnp.pad(b1, ((0, 0), (0, H1p - H1)))
    W2h = jnp.pad(W2[:H1], ((0, H1p - H1), (0, H2p - H2)))
    W2c = jnp.pad(W2[H1:], ((0, 0), (0, H2p - H2)))
    b2p = jnp.pad(b2, ((0, 0), (0, H2p - H2)))
    W3h = jnp.pad(W3[:H2], ((0, H2p - H2), (0, Dp - Do)))
    W3c = jnp.pad(W3[H2:], ((0, 0), (0, Dp - Do)))
    b3p = jnp.pad(b3, ((0, 0), (0, Dp - Do)))

    # Waug = [ W1 | [0; W2c] | [0; W3c] ]  (shape: (dim_in+dim_c, H1p+H2p+Dp))
    cond_block = jnp.concatenate(
        [jnp.zeros((dim_input, H2p + Dp), W1.dtype),
         jnp.concatenate([W2c, W3c], axis=1)],
        axis=0)
    Waug = jnp.concatenate([W1p, cond_block], axis=1)

    return (Waug.astype(mat_dtype),
            b1p.astype(jnp.float32),
            W2h.astype(mat_dtype),
            b2p.astype(jnp.float32),
            W3h.astype(mat_dtype),
            b3p.astype(jnp.float32),
            Do)


def cbc_network_pallas(states, conditioning, params, *, use_bf16=True,
                       tb_cap=1024):
    """params: (fan_in, fan_out) weights W1,W2,W3 and (1, fan_out) biases."""
    B, dim_in = states.shape
    dim_c = conditioning.shape[1]
    mat_dtype = jnp.bfloat16 if use_bf16 else jnp.float32

    Waug, b1p, W2h, b2p, W3h, b3p, Do = _prep_weights(
        params, dim_in, dim_c, mat_dtype)

    # Single fused (states|cond) activation slab, kept f32 (cast in-kernel).
    x0 = jnp.concatenate([states, conditioning], axis=1).astype(jnp.float32)

    # --- batch tiling ---------------------------------------------------
    # Big tiles amortize the ~0.35 us per-grid-step overhead; cap at ~half
    # the batch so there are >= 2 grid steps when possible (both v7x TCs get
    # work). bf16 tiles are 16-row aligned (2 rows / sublane), f32 8-row.
    row_align = 16 if use_bf16 else 8
    bp_min = _round_up(B, row_align)
    if bp_min >= 2 * row_align:
        TB = min(tb_cap, _round_up(pl.cdiv(bp_min, 2), row_align))
    else:
        TB = bp_min
    Bp = _round_up(B, TB)
    if Bp != B:
        x0 = jnp.pad(x0, ((0, Bp - B), (0, 0)))

    def act_spec(width):
        return pl.BlockSpec((TB, width), lambda i: (i, 0))

    def resident(arr):
        # Same block index every grid step -> stays VMEM-resident.
        return pl.BlockSpec(arr.shape, lambda i: (0, 0))

    out = pl.pallas_call(
        cbc_kernel,
        out_shape=jax.ShapeDtypeStruct((Bp, Do), jnp.float32),
        grid=(Bp // TB,),
        in_specs=[
            act_spec(dim_in + dim_c),            # x0 (states | cond)
            resident(Waug), resident(b1p),
            resident(W2h), resident(b2p),
            resident(W3h), resident(b3p),
        ],
        out_specs=pl.BlockSpec((TB, Do), lambda i: (i, 0)),
        compiler_params=pltpu.CompilerParams(
            dimension_semantics=("parallel",),       # batch steps across TCs
            vmem_limit_bytes=32 * 1024 * 1024),      # v5e default 16 MiB is tight
    )(x0, Waug, b1p, W2h, b2p, W3h, b3p)

    # Output already at its true width (no column slice); only drop padded
    # batch rows (they contain relu(bias) junk from zero-padded inputs).
    return out if Bp == B else out[:B]


def init_params(key, dim_input, dim_conditioning, dim_output, layers=(256, 256)):
    """PyTorch-Linear-style init: U(-1/sqrt(fan_in), 1/sqrt(fan_in))."""
    H1, H2 = layers
    dims = [
        ("W1", "b1", dim_input + dim_conditioning, H1),
        ("W2", "b2", H1 + dim_conditioning, H2),
        ("W3", "b3", H2 + dim_conditioning, dim_output),
    ]
    params = {}
    for wname, bname, fan_in, fan_out in dims:
        key, kw, kb = jax.random.split(key, 3)
        bound = 1.0 / jnp.sqrt(float(fan_in))
        params[wname] = jax.random.uniform(
            kw, (fan_in, fan_out), jnp.float32, -bound, bound)
        params[bname] = jax.random.uniform(
            kb, (1, fan_out), jnp.float32, -bound, bound)
    return params


def cbc_network_ref(states, conditioning, params):
    """Pure-JAX reference mirroring the torch forward (explicit concat)."""
    x = jnp.concatenate([states, conditioning], axis=1)
    h = jnp.maximum(x @ params["W1"] + params["b1"], 0.0)
    x = jnp.concatenate([h, conditioning], axis=1)
    h = jnp.maximum(x @ params["W2"] + params["b2"], 0.0)
    x = jnp.concatenate([h, conditioning], axis=1)
    return x @ params["W3"] + params["b3"]


if __name__ == "__main__":
    B = 8
    DIM_INPUT = 32
    DIM_COND = 16
    DIM_OUTPUT = 8
    LAYERS = (256, 256)   # PyTorch module default

    key = jax.random.PRNGKey(0)
    key, ks, kc = jax.random.split(key, 3)
    states = jax.random.normal(ks, (B, DIM_INPUT), jnp.float32)
    conditioning = jax.random.normal(kc, (B, DIM_COND), jnp.float32)
    params = init_params(key, DIM_INPUT, DIM_COND, DIM_OUTPUT, LAYERS)

    ref = cbc_network_ref(states, conditioning, params)

    # f32 matmul path (exact-ish).
    out_f32 = cbc_network_pallas(states, conditioning, params, use_bf16=False)
    out_f32 = jax.block_until_ready(out_f32)
    assert out_f32.shape == (B, DIM_OUTPUT)
    assert jnp.allclose(out_f32, ref, atol=1e-4, rtol=1e-4)

    # Default bf16 matmul-input path (f32 accumulate / bias / ReLU).
    out_bf16 = cbc_network_pallas(states, conditioning, params)
    out_bf16 = jax.block_until_ready(out_bf16)
    assert out_bf16.shape == (B, DIM_OUTPUT)
    assert jnp.allclose(out_bf16, ref, atol=0.1, rtol=0.1)

    # Multi-grid-step + row-padded path (exercises TB choice and row slicing).
    B2 = 72
    key, ks2, kc2 = jax.random.split(key, 3)
    states2 = jax.random.normal(ks2, (B2, DIM_INPUT), jnp.float32)
    cond2 = jax.random.normal(kc2, (B2, DIM_COND), jnp.float32)
    ref2 = cbc_network_ref(states2, cond2, params)
    out2 = cbc_network_pallas(states2, cond2, params, use_bf16=False)
    out2 = jax.block_until_ready(out2)
    assert out2.shape == (B2, DIM_OUTPUT)
    assert jnp.allclose(out2, ref2, atol=1e-4, rtol=1e-4)

    print("KERNEL_OK")
</pallas_src>

<mosaic_0001>
module attributes {stable_mosaic.version = 11 : i64} {
  func.func @cbc_kernel(%arg0: i32, %arg1: memref<8x48xf32, #tpu.memory_space<vmem>>, %arg2: memref<48x640xf32, #tpu.memory_space<vmem>>, %arg3: memref<1x256xf32, #tpu.memory_space<vmem>>, %arg4: memref<256x256xf32, #tpu.memory_space<vmem>>, %arg5: memref<1x256xf32, #tpu.memory_space<vmem>>, %arg6: memref<256x128xf32, #tpu.memory_space<vmem>>, %arg7: memref<1x128xf32, #tpu.memory_space<vmem>>, %arg8: memref<8x8xf32, #tpu.memory_space<vmem>>) attributes {dimension_semantics = [#tpu.dimension_semantics<parallel>], iteration_bounds = array<i64: 1>, scalar_prefetch = 0 : i64, scratch_operands = 0 : i64, tpu.core_type = #tpu.core_type<tc>, window_params = [{transform_indices = @transform_0, window_bounds = array<i64: 8, 48>}, {pipeline_mode = #tpu.pipeline_mode<synchronous>, transform_indices = @transform_1, window_bounds = array<i64: 48, 640>}, {pipeline_mode = #tpu.pipeline_mode<synchronous>, transform_indices = @transform_2, window_bounds = array<i64: 1, 256>}, {pipeline_mode = #tpu.pipeline_mode<synchronous>, transform_indices = @transform_3, window_bounds = array<i64: 256, 256>}, {pipeline_mode = #tpu.pipeline_mode<synchronous>, transform_indices = @transform_4, window_bounds = array<i64: 1, 256>}, {pipeline_mode = #tpu.pipeline_mode<synchronous>, transform_indices = @transform_5, window_bounds = array<i64: 256, 128>}, {pipeline_mode = #tpu.pipeline_mode<synchronous>, transform_indices = @transform_6, window_bounds = array<i64: 1, 128>}, {transform_indices = @transform_7, window_bounds = array<i64: 8, 8>}]} {
    %c0 = arith.constant 0 : index
    %c0_0 = arith.constant 0 : index
    %0 = vector.load %arg1[%c0, %c0_0] : memref<8x48xf32, #tpu.memory_space<vmem>>, vector<8x48xf32>
    %c0_1 = arith.constant 0 : index
    %c0_2 = arith.constant 0 : index
    %1 = vector.load %arg2[%c0_1, %c0_2] : memref<48x640xf32, #tpu.memory_space<vmem>>, vector<48x640xf32>
    %cst = arith.constant dense<0.000000e+00> : vector<8x640xf32>
    %2 = tpu.matmul %0, %1, %cst {dimension_numbers = #tpu.dot_dimension_numbers<[1], [0], [0], [1], [0, 0, 1, 1], [], []>} : vector<8x48xf32>, vector<48x640xf32>, vector<8x640xf32> -> vector<8x640xf32>
    %3 = vector.extract_strided_slice %2 {offsets = [0, 0], sizes = [8, 256], strides = [1, 1]} : vector<8x640xf32> to vector<8x256xf32>
    %c0_3 = arith.constant 0 : index
    %c0_4 = arith.constant 0 : index
    %4 = vector.load %arg3[%c0_3, %c0_4] : memref<1x256xf32, #tpu.memory_space<vmem>>, vector<1x256xf32>
    %5 = vector.broadcast %4 : vector<1x256xf32> to vector<8x256xf32>
    %6 = arith.addf %3, %5 : vector<8x256xf32>
    %cst_5 = arith.constant 0.000000e+00 : f32
    %7 = vector.broadcast %cst_5 : f32 to vector<8x256xf32>
    %8 = arith.maximumf %6, %7 : vector<8x256xf32>
    %c0_6 = arith.constant 0 : index
    %c0_7 = arith.constant 0 : index
    %9 = vector.load %arg4[%c0_6, %c0_7] : memref<256x256xf32, #tpu.memory_space<vmem>>, vector<256x256xf32>
    %cst_8 = arith.constant dense<0.000000e+00> : vector<8x256xf32>
    %10 = tpu.matmul %8, %9, %cst_8 {dimension_numbers = #tpu.dot_dimension_numbers<[1], [0], [0], [1], [0, 0, 1, 1], [], []>} : vector<8x256xf32>, vector<256x256xf32>, vector<8x256xf32> -> vector<8x256xf32>
    %11 = vector.extract_strided_slice %2 {offsets = [0, 256], sizes = [8, 256], strides = [1, 1]} : vector<8x640xf32> to vector<8x256xf32>
    %12 = arith.addf %10, %11 : vector<8x256xf32>
    %c0_9 = arith.constant 0 : index
    %c0_10 = arith.constant 0 : index
    %13 = vector.load %arg5[%c0_9, %c0_10] : memref<1x256xf32, #tpu.memory_space<vmem>>, vector<1x256xf32>
    %14 = vector.broadcast %13 : vector<1x256xf32> to vector<8x256xf32>
    %15 = arith.addf %12, %14 : vector<8x256xf32>
    %cst_11 = arith.constant 0.000000e+00 : f32
    %16 = vector.broadcast %cst_11 : f32 to vector<8x256xf32>
    %17 = arith.maximumf %15, %16 : vector<8x256xf32>
    %c0_12 = arith.constant 0 : index
    %c0_13 = arith.constant 0 : index
    %18 = vector.load %arg6[%c0_12, %c0_13] : memref<256x128xf32, #tpu.memory_space<vmem>>, vector<256x128xf32>
    %cst_14 = arith.constant dense<0.000000e+00> : vector<8x128xf32>
    %19 = tpu.matmul %17, %18, %cst_14 {dimension_numbers = #tpu.dot_dimension_numbers<[1], [0], [0], [1], [0, 0, 1, 1], [], []>} : vector<8x256xf32>, vector<256x128xf32>, vector<8x128xf32> -> vector<8x128xf32>
    %20 = vector.extract_strided_slice %2 {offsets = [0, 512], sizes = [8, 128], strides = [1, 1]} : vector<8x640xf32> to vector<8x128xf32>
    %21 = arith.addf %19, %20 : vector<8x128xf32>
    %c0_15 = arith.constant 0 : index
    %c0_16 = arith.constant 0 : index
    %22 = vector.load %arg7[%c0_15, %c0_16] : memref<1x128xf32, #tpu.memory_space<vmem>>, vector<1x128xf32>
    %23 = vector.broadcast %22 : vector<1x128xf32> to vector<8x128xf32>
    %24 = arith.addf %21, %23 : vector<8x128xf32>
    %25 = vector.extract_strided_slice %24 {offsets = [0, 0], sizes = [8, 8], strides = [1, 1]} : vector<8x128xf32> to vector<8x8xf32>
    %c0_17 = arith.constant 0 : index
    %c0_18 = arith.constant 0 : index
    %26 = vector.load %arg8[%c0_17, %c0_18] : memref<8x8xf32, #tpu.memory_space<vmem>>, vector<8x8xf32>
    tpu.vector_store %arg8[%c0_17, %c0_18], %25 {strides = array<i32>} : memref<8x8xf32, #tpu.memory_space<vmem>>, vector<8x8xf32>,
    return
  }
  func.func @transform_0(%arg0: i32) -> (i32, i32) {
    %c0_i32 = arith.constant 0 : i32
    %c0_i32_0 = arith.constant 0 : i32
    return %arg0, %c0_i32 : i32, i32
  }
  func.func @transform_1(%arg0: i32) -> (i32, i32) {
    %c0_i32 = arith.constant 0 : i32
    %c0_i32_0 = arith.constant 0 : i32
    %c0_i32_1 = arith.constant 0 : i32
    return %c0_i32, %c0_i32_0 : i32, i32
  }
  func.func @transform_2(%arg0: i32) -> (i32, i32) {
    %c0_i32 = arith.constant 0 : i32
    %c0_i32_0 = arith.constant 0 : i32
    %c0_i32_1 = arith.constant 0 : i32
    return %c0_i32, %c0_i32_0 : i32, i32
  }
  func.func @transform_3(%arg0: i32) -> (i32, i32) {
    %c0_i32 = arith.constant 0 : i32
    %c0_i32_0 = arith.constant 0 : i32
    %c0_i32_1 = arith.constant 0 : i32
    return %c0_i32, %c0_i32_0 : i32, i32
  }
  func.func @transform_4(%arg0: i32) -> (i32, i32) {
    %c0_i32 = arith.constant 0 : i32
    %c0_i32_0 = arith.constant 0 : i32
    %c0_i32_1 = arith.constant 0 : i32
    return %c0_i32, %c0_i32_0 : i32, i32
  }
  func.func @transform_5(%arg0: i32) -> (i32, i32) {
    %c0_i32 = arith.constant 0 : i32
    %c0_i32_0 = arith.constant 0 : i32
    %c0_i32_1 = arith.constant 0 : i32
    return %c0_i32, %c0_i32_0 : i32, i32
  }
  func.func @transform_6(%arg0: i32) -> (i32, i32) {
    %c0_i32 = arith.constant 0 : i32
    %c0_i32_0 = arith.constant 0 : i32
    %c0_i32_1 = arith.constant 0 : i32
    return %c0_i32, %c0_i32_0 : i32, i32
  }
  func.func @transform_7(%arg0: i32) -> (i32, i32) {
    %c0_i32 = arith.constant 0 : i32
    %c0_i32_0 = arith.constant 0 : i32
    return %arg0, %c0_i32 : i32, i32
  }
}

</mosaic_0001>

<llo_original>
// kernel: tpu_custom_call.1
$region0: #{tpu_custom_call.1}
  #allocation0 [shape = 'u32[]', space=smem, size = 0x4, offset = 0x4, fixed_abs, tag = 'smem constant byte address 0x4 - core index']
  #allocation1 [shape = 'u32[144,128]{1,0:T(1,128)}', space=vmem, size = 0x12000, scoped, tag = 'internal scratch']
  %s0 = inlined_call_operand.hbm [shape: f32[8,48], index: 0, kind: input, shape index: {}]
  %s1 = inlined_call_operand.hbm [shape: f32[48,640], index: 1, kind: input, shape index: {}]
  %s2 = inlined_call_operand.vmem [shape: f32[1,256], index: 2, kind: input, shape index: {}]
  %s3 = inlined_call_operand.hbm [shape: f32[256,256], index: 3, kind: input, shape index: {}]
  %s4 = inlined_call_operand.vmem [shape: f32[1,256], index: 4, kind: input, shape index: {}]
  %s5 = inlined_call_operand.hbm [shape: f32[256,128], index: 5, kind: input, shape index: {}]
  %s6 = inlined_call_operand.vmem [shape: f32[1,128], index: 6, kind: input, shape index: {}]
  %s7 = inlined_call_operand.hbm [shape: f32[8,8], index: 7, kind: output, shape index: {}]
  %s8 = sld [smem:[#allocation0]]
  $region54: #{tpu_custom_call.1} parent=0
    _
  %s10 = ssub.s32 1, %s8
  %s11 = scalar_select 0, %s10, %s8
  $region1: #{tpu_custom_call.1} parent=0
    #allocation2 [shape = 'u8[4096]{0}', space=vmem, size = 0x1000, scoped, tag = 'input window, operand 0, single buffered']
    #allocation3 [shape = 's32[1]{0}', space=sflag, size = 0x4, scoped, tag = 'scoped memory for tpu_custom_call.1']
    #allocation4 [shape = 's32[1]{0}', space=sflag, size = 0x4, scoped, tag = 'scoped memory for tpu_custom_call.1']
    #allocation5 [shape = 'u8[122880]{0}', space=vmem, size = 0x1e000, scoped, tag = 'input window, operand 1, single buffered']
    #allocation6 [shape = 's32[1]{0}', space=sflag, size = 0x4, scoped, tag = 'scoped memory for tpu_custom_call.1']
    #allocation7 [shape = 'u8[262144]{0}', space=vmem, size = 0x40000, scoped, tag = 'input window, operand 3, single buffered']
    #allocation8 [shape = 'u8[131072]{0}', space=vmem, size = 0x20000, scoped, tag = 'input window, operand 5, single buffered']
    #allocation9 [shape = 's32[1]{0}', space=sflag, size = 0x4, scoped, tag = 'scoped memory for tpu_custom_call.1']
    #allocation10 [shape = 'u8[4096]{0}', space=vmem, size = 0x1000, scoped, tag = 'output window, operand 0, single buffered']
    %12 = vsyncpa [#allocation3], 0
    %13 = vsyncpa [#allocation6], 0
    %14 = vsyncpa [#allocation9], 0
    %15 = vsyncpa [#allocation4], 0
    // Predicated region
    $region2: #{tpu_custom_call.1} parent=1 // pred_check
      _
    $region3: #{tpu_custom_call.1} parent=1 // pred_check_branch
      %17 = sbr.rel (0) target = $region5
    $region4: #{tpu_custom_call.1} parent=1 // pred_region
      %s19 = ssub.s32 128, 128
      %20 = vsyncadd [#allocation3], %s19
      %s22 = sshll.u32 [#allocation2], 4
      %s23 = int_to_ptr.vmem [resolvable:$true] %s22
      %25 = dma.hbm_to_vmem [thread:$0]  %s0, 128, %s23, [#allocation3]
    $region5: #{tpu_custom_call.1} parent=1 // pred_fallthru
      _
    // Predicated region
    $region6: #{tpu_custom_call.1} parent=1 // pred_check
      _
    $region7: #{tpu_custom_call.1} parent=1 // pred_check_branch
      %27 = sbr.rel (0) target = $region9
    $region8: #{tpu_custom_call.1} parent=1 // pred_region
      %s29 = ssub.s32 3840, 3840
      %30 = vsyncadd [#allocation6], %s29
      %s31 = sshll.u32 [#allocation5], 4
      %s32 = int_to_ptr.vmem [resolvable:$true] %s31
      %37 = dma.hbm_to_vmem [thread:$0]  %s1, 3840, %s32, [#allocation6], 640, 640, 40
    $region9: #{tpu_custom_call.1} parent=1 // pred_fallthru
      _
    // Predicated region
    $region10: #{tpu_custom_call.1} parent=1 // pred_check
      _
    $region11: #{tpu_custom_call.1} parent=1 // pred_check_branch
      %39 = sbr.rel (0) target = $region13
    $region12: #{tpu_custom_call.1} parent=1 // pred_region
      _
    $region13: #{tpu_custom_call.1} parent=1 // pred_fallthru
      _
    // Predicated region
    $region14: #{tpu_custom_call.1} parent=1 // pred_check
      _
    $region15: #{tpu_custom_call.1} parent=1 // pred_check_branch
      %41 = sbr.rel (0) target = $region17
    $region16: #{tpu_custom_call.1} parent=1 // pred_region
      %s43 = ssub.s32 8192, 8192
      %44 = vsyncadd [#allocation6], %s43
      %s45 = sshll.u32 [#allocation7], 4
      %s46 = int_to_ptr.vmem [resolvable:$true] %s45
      %51 = dma.hbm_to_vmem [thread:$0]  %s3, 8192, %s46, [#allocation6], 256, 256, 16
    $region17: #{tpu_custom_call.1} parent=1 // pred_fallthru
      _
    // Predicated region
    $region18: #{tpu_custom_call.1} parent=1 // pred_check
      _
    $region19: #{tpu_custom_call.1} parent=1 // pred_check_branch
      %53 = sbr.rel (0) target = $region21
    $region20: #{tpu_custom_call.1} parent=1 // pred_region
      _
    $region21: #{tpu_custom_call.1} parent=1 // pred_fallthru
      _
    // Predicated region
    $region22: #{tpu_custom_call.1} parent=1 // pred_check
      _
    $region23: #{tpu_custom_call.1} parent=1 // pred_check_branch
      %55 = sbr.rel (0) target = $region25
    $region24: #{tpu_custom_call.1} parent=1 // pred_region
      %s57 = ssub.s32 4096, 4096
      %58 = vsyncadd [#allocation9], %s57
      %s59 = sshll.u32 [#allocation8], 4
      %s60 = int_to_ptr.vmem [resolvable:$true] %s59
      %65 = dma.hbm_to_vmem [thread:$0]  %s5, 4096, %s60, [#allocation9], 128, 128, 8
    $region25: #{tpu_custom_call.1} parent=1 // pred_fallthru
      _
    // Predicated region
    $region26: #{tpu_custom_call.1} parent=1 // pred_check
      _
    $region27: #{tpu_custom_call.1} parent=1 // pred_check_branch
      %67 = sbr.rel (0) target = $region29
    $region28: #{tpu_custom_call.1} parent=1 // pred_region
      _
    $region29: #{tpu_custom_call.1} parent=1 // pred_fallthru
      _
    // Predicated region
    $region30: #{tpu_custom_call.1} parent=1 // pred_check
      _
    $region31: #{tpu_custom_call.1} parent=1 // pred_check_branch
      %69 = sbr.rel (0) target = $region33
    $region32: #{tpu_custom_call.1} parent=1 // pred_region
      %70 = dma.done [#allocation3], 128
    $region33: #{tpu_custom_call.1} parent=1 // pred_fallthru
      _
    // Predicated region
    $region34: #{tpu_custom_call.1} parent=1 // pred_check
      _
    $region35: #{tpu_custom_call.1} parent=1 // pred_check_branch
      %72 = sbr.rel (0) target = $region37
    $region36: #{tpu_custom_call.1} parent=1 // pred_region
      %73 = dma.done [#allocation6], 3840
    $region37: #{tpu_custom_call.1} parent=1 // pred_fallthru
      _
    // Predicated region
    $region38: #{tpu_custom_call.1} parent=1 // pred_check
      _
    $region39: #{tpu_custom_call.1} parent=1 // pred_check_branch
      %75 = sbr.rel (0) target = $region41
    $region40: #{tpu_custom_call.1} parent=1 // pred_region
      %76 = dma.done [#allocation6], 8192
    $region41: #{tpu_custom_call.1} parent=1 // pred_fallthru
      _
    // Predicated region
    $region42: #{tpu_custom_call.1} parent=1 // pred_check
      _
    $region43: #{tpu_custom_call.1} parent=1 // pred_check_branch
      %78 = sbr.rel (0) target = $region45
    $region44: #{tpu_custom_call.1} parent=1 // pred_region
      %79 = dma.done [#allocation9], 4096
    $region45: #{tpu_custom_call.1} parent=1 // pred_fallthru
      _
    %v80 = vld [vmem:[#allocation2] sm:$0xff]
    %v81 = vld [vmem:[#allocation5] sm:$0xff]
    %v82 = vld [vmem:[#allocation5 + $0x8] sm:$0xff]
    %v83 = vld [vmem:[#allocation5 + $0x10] sm:$0xff]
    %v84 = vld [vmem:[#allocation5 + $0x18] sm:$0xff]
    %v85 = vld [vmem:[#allocation5 + $0x20] sm:$0xff]
    %v86 = vld [vmem:[#allocation5 + $0x28] sm:$0xff]
    %v87 = vld [vmem:[#allocation5 + $0x30] sm:$0xff]
    %v88 = vld [vmem:[#allocation5 + $0x38] sm:$0xff]
    %v89 = vld [vmem:[#allocation5 + $0x40] sm:$0xff]
    %v90 = vld [vmem:[#allocation5 + $0x48] sm:$0xff]
    %v91 = vld [vmem:[#allocation5 + $0x50] sm:$0xff]
    %v92 = vld [vmem:[#allocation5 + $0x58] sm:$0xff]
    %v93 = vld [vmem:[#allocation5 + $0x60] sm:$0xff]
    %v94 = vld [vmem:[#allocation5 + $0x68] sm:$0xff]
    %v95 = vld [vmem:[#allocation5 + $0x70] sm:$0xff]
    %v96 = vld [vmem:[#allocation5 + $0x78] sm:$0xff]
    %v97 = vld [vmem:[#allocation5 + $0x80] sm:$0xff]
    %v98 = vld [vmem:[#allocation5 + $0x88] sm:$0xff]
    %v99 = vld [vmem:[#allocation5 + $0x90] sm:$0xff]
    %v100 = vld [vmem:[#allocation5 + $0x98] sm:$0xff]
    %v101 = vld [vmem:[#allocation5 + $0xa0] sm:$0xff]
    %v102 = vld [vmem:[#allocation5 + $0xa8] sm:$0xff]
    %v103 = vld [vmem:[#allocation5 + $0xb0] sm:$0xff]
    %v104 = vld [vmem:[#allocation5 + $0xb8] sm:$0xff]
    %v105 = vld [vmem:[#allocation5 + $0xc0] sm:$0xff]
    %v106 = vld [vmem:[#allocation5 + $0xc8] sm:$0xff]
    %v107 = vld [vmem:[#allocation5 + $0xd0] sm:$0xff]
    %v108 = vld [vmem:[#allocation5 + $0xd8] sm:$0xff]
    %v109 = vld [vmem:[#allocation5 + $0xe0] sm:$0xff]
    %v110 = vld [vmem:[#allocation5 + $0xe8] sm:$0xff]
    %vm111 = vcmask 392192
    %v113 = vsel %vm111, %v80, 0
    %115 = vmatprep.subr.mxu0 0.0
    %116 = vmatpush1.msra.mxu0 0.0
    %117 = vmatprep.subr.mxu0 0.0
    %118 = vmatpush1.msra.mxu0 0.0
    %119 = vmatprep.subr.mxu0 0.0
    %120 = vmatpush1.msra.mxu0 0.0
    %121 = vmatprep.subr.mxu0 0.0
    %122 = vmatpush1.msra.mxu0 0.0
    %123 = vmatprep.subr.mxu0 0.0
    %124 = vmatpush1.msra.mxu0 0.0
    %125 = vmatprep.subr.mxu0 0.0
    %126 = vmatpush1.msra.mxu0 0.0
    %127 = vmatprep.subr.mxu0 0.0
    %128 = vmatpush1.msra.mxu0 0.0
    %129 = vmatprep.subr.mxu0 0.0
    %130 = vmatpush1.msra.mxu0 0.0
    %131 = vmatprep.subr.mxu0 0.0
    %132 = vmatpush1.msra.mxu0 0.0
    %133 = vmatprep.subr.mxu0 0.0
    %134 = vmatpush1.msra.mxu0 0.0
    %135 = vmatprep.subr.mxu0 %v107
    %136 = vmatpush1.msra.mxu0 %v106
    %137 = vmatprep.subr.mxu0 %v102
    %138 = vmatpush1.msra.mxu0 %v101
    %139 = vmatprep.subr.mxu0 %v97
    %140 = vmatpush1.msra.mxu0 %v96
    %141 = vmatprep.subr.mxu0 %v92
    %142 = vmatpush1.msra.mxu0 %v91
    %143 = vmatprep.subr.mxu0 %v87
    %144 = vmatpush1.msra.mxu0 %v86
    %145 = vmatprep.subr.mxu0 %v82
    %146 = vmatpush1.msra.mxu0 %v81
    %147 = vmatprep.subr.mxu0 0.0
    %148 = vmatpush2.msra.mxu0 0.0
    %149 = vmatprep.subr.mxu0 0.0
    %150 = vmatpush2.msra.mxu0 0.0
    %151 = vmatprep.subr.mxu0 0.0
    %152 = vmatpush2.msra.mxu0 0.0
    %153 = vmatprep.subr.mxu0 0.0
    %154 = vmatpush2.msra.mxu0 0.0
    %155 = vmatprep.subr.mxu0 0.0
    %156 = vmatpush2.msra.mxu0 0.0
    %157 = vmatprep.subr.mxu0 0.0
    %158 = vmatpush2.msra.mxu0 0.0
    %159 = vmatprep.subr.mxu0 0.0
    %160 = vmatpush2.msra.mxu0 0.0
    %161 = vmatprep.subr.mxu0 0.0
    %162 = vmatpush2.msra.mxu0 0.0
    %163 = vmatprep.subr.mxu0 0.0
    %164 = vmatpush2.msra.mxu0 0.0
    %165 = vmatprep.subr.mxu0 0.0
    %166 = vmatpush2.msra.mxu0 0.0
    %167 = vmatprep.subr.mxu0 0.0
    %168 = vmatpush2.msra.mxu0 0.0
    %169 = vmatprep.subr.mxu0 0.0
    %170 = vmatpush2.msra.mxu0 0.0
    %171 = vmatprep.subr.mxu0 0.0
    %172 = vmatpush2.msra.mxu0 0.0
    %173 = vmatprep.subr.mxu0 0.0
    %174 = vmatpush2.msra.mxu0 0.0
    %175 = vmatprep.subr.mxu0 0.0
    %176 = vmatpush2.msra.mxu0 0.0
    %177 = vmatprep.subr.mxu0 0.0
    %178 = vmatpush2.msra.mxu0 0.0
    %179 = vmatprep.mubr.f32.mxu0 0.0
    %180 = vmatmul.mubr.f32.gmra.mxu0 %v113
    %v181 = vpop.f32.mrf.mxu0
    %v182 = vadd.f32 0.0, %v181
    %v183 = vpop.f32.mrf.mxu0
    %v184 = vadd.f32 0.0, %v183
    %185 = vdwg.mxu0
    %186 = vmatprep.subr.mxu0 0.0
    %187 = vmatpush1.msra.mxu0 0.0
    %188 = vmatprep.subr.mxu0 0.0
    %189 = vmatpush1.msra.mxu0 0.0
    %190 = vmatprep.subr.mxu0 0.0
    %191 = vmatpush1.msra.mxu0 0.0
    %192 = vmatprep.subr.mxu0 0.0
    %193 = vmatpush1.msra.mxu0 0.0
    %194 = vmatprep.subr.mxu0 0.0
    %195 = vmatpush1.msra.mxu0 0.0
    %196 = vmatprep.subr.mxu0 0.0
    %197 = vmatpush1.msra.mxu0 0.0
    %198 = vmatprep.subr.mxu0 0.0
    %199 = vmatpush1.msra.mxu0 0.0
    %200 = vmatprep.subr.mxu0 0.0
    %201 = vmatpush1.msra.mxu0 0.0
    %202 = vmatprep.subr.mxu0 0.0
    %203 = vmatpush1.msra.mxu0 0.0
    %204 = vmatprep.subr.mxu0 0.0
    %205 = vmatpush1.msra.mxu0 0.0
    %206 = vmatprep.subr.mxu0 %v109
    %207 = vmatpush1.msra.mxu0 %v108
    %208 = vmatprep.subr.mxu0 %v104
    %209 = vmatpush1.msra.mxu0 %v103
    %210 = vmatprep.subr.mxu0 %v99
    %211 = vmatpush1.msra.mxu0 %v98
    %212 = vmatprep.subr.mxu0 %v94
    %213 = vmatpush1.msra.mxu0 %v93
    %214 = vmatprep.subr.mxu0 %v89
    %215 = vmatpush1.msra.mxu0 %v88
    %216 = vmatprep.subr.mxu0 %v84
    %217 = vmatpush1.msra.mxu0 %v83
    %218 = vmatprep.subr.mxu0 0.0
    %219 = vmatpush2.msra.mxu0 0.0
    %220 = vmatprep.subr.mxu0 0.0
    %221 = vmatpush2.msra.mxu0 0.0
    %222 = vmatprep.subr.mxu0 0.0
    %223 = vmatpush2.msra.mxu0 0.0
    %224 = vmatprep.subr.mxu0 0.0
    %225 = vmatpush2.msra.mxu0 0.0
    %226 = vmatprep.subr.mxu0 0.0
    %227 = vmatpush2.msra.mxu0 0.0
    %228 = vmatprep.subr.mxu0 0.0
    %229 = vmatpush2.msra.mxu0 0.0
    %230 = vmatprep.subr.mxu0 0.0
    %231 = vmatpush2.msra.mxu0 0.0
    %232 = vmatprep.subr.mxu0 0.0
    %233 = vmatpush2.msra.mxu0 0.0
    %234 = vmatprep.subr.mxu0 0.0
    %235 = vmatpush2.msra.mxu0 0.0
    %236 = vmatprep.subr.mxu0 0.0
    %237 = vmatpush2.msra.mxu0 0.0
    %238 = vmatprep.subr.mxu0 0.0
    %239 = vmatpush2.msra.mxu0 0.0
    %240 = vmatprep.subr.mxu0 0.0
    %241 = vmatpush2.msra.mxu0 0.0
    %242 = vmatprep.subr.mxu0 0.0
    %243 = vmatpush2.msra.mxu0 0.0
    %244 = vmatprep.subr.mxu0 0.0
    %245 = vmatpush2.msra.mxu0 0.0
    %246 = vmatprep.subr.mxu0 0.0
    %247 = vmatpush2.msra.mxu0 0.0
    %248 = vmatprep.subr.mxu0 0.0
    %249 = vmatpush2.msra.mxu0 0.0
    %250 = vmatprep.mubr.f32.mxu0 0.0
    %251 = vmatmul.mubr.f32.gmra.mxu0 %v113
    %v252 = vpop.f32.mrf.mxu0
    %v253 = vadd.f32 0.0, %v252
    %v254 = vpop.f32.mrf.mxu0
    %v255 = vadd.f32 0.0, %v254
    %256 = vdwg.mxu0
    %257 = vmatprep.subr.mxu0 0.0
    %258 = vmatpush1.msra.mxu0 0.0
    %259 = vmatprep.subr.mxu0 0.0
    %260 = vmatpush1.msra.mxu0 0.0
    %261 = vmatprep.subr.mxu0 0.0
    %262 = vmatpush1.msra.mxu0 0.0
    %263 = vmatprep.subr.mxu0 0.0
    %264 = vmatpush1.msra.mxu0 0.0
    %265 = vmatprep.subr.mxu0 0.0
    %266 = vmatpush1.msra.mxu0 0.0
    %267 = vmatprep.subr.mxu0 0.0
    %268 = vmatpush1.msra.mxu0 0.0
    %269 = vmatprep.subr.mxu0 0.0
    %270 = vmatpush1.msra.mxu0 0.0
    %271 = vmatprep.subr.mxu0 0.0
    %272 = vmatpush1.msra.mxu0 0.0
    %273 = vmatprep.subr.mxu0 0.0
    %274 = vmatpush1.msra.mxu0 0.0
    %275 = vmatprep.subr.mxu0 0.0
    %276 = vmatpush1.msra.mxu0 0.0
    %277 = vmatprep.subr.mxu0 0.0
    %278 = vmatpush1.msra.mxu0 %v110
    %279 = vmatprep.subr.mxu0 0.0
    %280 = vmatpush1.msra.mxu0 %v105
    %281 = vmatprep.subr.mxu0 0.0
    %282 = vmatpush1.msra.mxu0 %v100
    %283 = vmatprep.subr.mxu0 0.0
    %284 = vmatpush1.msra.mxu0 %v95
    %285 = vmatprep.subr.mxu0 0.0
    %286 = vmatpush1.msra.mxu0 %v90
    %287 = vmatprep.subr.mxu0 0.0
    %288 = vmatpush1.msra.mxu0 %v85
    %289 = vmatprep.subr.mxu0 0.0
    %290 = vmatpush2.msra.mxu0 0.0
    %291 = vmatprep.subr.mxu0 0.0
    %292 = vmatpush2.msra.mxu0 0.0
    %293 = vmatprep.subr.mxu0 0.0
    %294 = vmatpush2.msra.mxu0 0.0
    %295 = vmatprep.subr.mxu0 0.0
    %296 = vmatpush2.msra.mxu0 0.0
    %297 = vmatprep.subr.mxu0 0.0
    %298 = vmatpush2.msra.mxu0 0.0
    %299 = vmatprep.subr.mxu0 0.0
    %300 = vmatpush2.msra.mxu0 0.0
    %301 = vmatprep.subr.mxu0 0.0
    %302 = vmatpush2.msra.mxu0 0.0
    %303 = vmatprep.subr.mxu0 0.0
    %304 = vmatpush2.msra.mxu0 0.0
    %305 = vmatprep.subr.mxu0 0.0
    %306 = vmatpush2.msra.mxu0 0.0
    %307 = vmatprep.subr.mxu0 0.0
    %308 = vmatpush2.msra.mxu0 0.0
    %309 = vmatprep.subr.mxu0 0.0
    %310 = vmatpush2.msra.mxu0 0.0
    %311 = vmatprep.subr.mxu0 0.0
    %312 = vmatpush2.msra.mxu0 0.0
    %313 = vmatprep.subr.mxu0 0.0
    %314 = vmatpush2.msra.mxu0 0.0
    %315 = vmatprep.subr.mxu0 0.0
    %316 = vmatpush2.msra.mxu0 0.0
    %317 = vmatprep.subr.mxu0 0.0
    %318 = vmatpush2.msra.mxu0 0.0
    %319 = vmatprep.subr.mxu0 0.0
    %320 = vmatpush2.msra.mxu0 0.0
    %321 = vmatprep.mubr.f32.mxu0 0.0
    %322 = vmatmul.mubr.f32.gmra.mxu0 %v113
    %v323 = vpop.f32.mrf.mxu0
    %v324 = vadd.f32 0.0, %v323
    %v325 = vpop.f32.mrf.mxu0
    %326 = vdwg.mxu0
    %v327 = vld [vmem:[%s2] sm:$0x3]
    %v329 = vlaneseq
    %v330 = vshrl.u32 %v329, 7
    %v331 = vsub.s32 0, %v330
    %v332 = vrot.slane %v327, %v331
    %v333 = vlaneseq
    %v334 = vshrl.u32 %v333, 7
    %v335 = vsub.s32 1, %v334
    %v336 = vrot.slane %v327, %v335
    %v339 = vadd.f32 %v182, %v332
    %v340 = vadd.f32 %v184, %v336
    %v341 = vmax.f32 %v339, 0.0
    %v342 = vmax.f32 %v340, 0.0
    %v343 = vld [vmem:[#allocation7] sm:$0xff]
    %v344 = vld [vmem:[#allocation7 + $0x8] sm:$0xff]
    %v345 = vld [vmem:[#allocation7 + $0x10] sm:$0xff]
    %v346 = vld [vmem:[#allocation7 + $0x18] sm:$0xff]
    %v347 = vld [vmem:[#allocation7 + $0x20] sm:$0xff]
    %v348 = vld [vmem:[#allocation7 + $0x28] sm:$0xff]
    %v349 = vld [vmem:[#allocation7 + $0x30] sm:$0xff]
    %v350 = vld [vmem:[#allocation7 + $0x38] sm:$0xff]
    %v351 = vld [vmem:[#allocation7 + $0x40] sm:$0xff]
    %v352 = vld [vmem:[#allocation7 + $0x48] sm:$0xff]
    %v353 = vld [vmem:[#allocation7 + $0x50] sm:$0xff]
    %v354 = vld [vmem:[#allocation7 + $0x58] sm:$0xff]
    %v355 = vld [vmem:[#allocation7 + $0x60] sm:$0xff]
    %v356 = vld [vmem:[#allocation7 + $0x68] sm:$0xff]
    %v357 = vld [vmem:[#allocation7 + $0x70] sm:$0xff]
    %v358 = vld [vmem:[#allocation7 + $0x78] sm:$0xff]
    %v359 = vld [vmem:[#allocation7 + $0x80] sm:$0xff]
    %v360 = vld [vmem:[#allocation7 + $0x88] sm:$0xff]
    %v361 = vld [vmem:[#allocation7 + $0x90] sm:$0xff]
    %v362 = vld [vmem:[#allocation7 + $0x98] sm:$0xff]
    %v363 = vld [vmem:[#allocation7 + $0xa0] sm:$0xff]
    %v364 = vld [vmem:[#allocation7 + $0xa8] sm:$0xff]
    %v365 = vld [vmem:[#allocation7 + $0xb0] sm:$0xff]
    %v366 = vld [vmem:[#allocation7 + $0xb8] sm:$0xff]
    %v367 = vld [vmem:[#allocation7 + $0xc0] sm:$0xff]
    %v368 = vld [vmem:[#allocation7 + $0xc8] sm:$0xff]
    %v369 = vld [vmem:[#allocation7 + $0xd0] sm:$0xff]
    %v370 = vld [vmem:[#allocation7 + $0xd8] sm:$0xff]
    %v371 = vld [vmem:[#allocation7 + $0xe0] sm:$0xff]
    %v372 = vld [vmem:[#allocation7 + $0xe8] sm:$0xff]
    %v373 = vld [vmem:[#allocation7 + $0xf0] sm:$0xff]
    %v374 = vld [vmem:[#allocation7 + $0xf8] sm:$0xff]
    %v375 = vld [vmem:[#allocation7 + $0x100] sm:$0xff]
    %v376 = vld [vmem:[#allocation7 + $0x108] sm:$0xff]
    %v377 = vld [vmem:[#allocation7 + $0x110] sm:$0xff]
    %v378 = vld [vmem:[#allocation7 + $0x118] sm:$0xff]
    %v379 = vld [vmem:[#allocation7 + $0x120] sm:$0xff]
    %v380 = vld [vmem:[#allocation7 + $0x128] sm:$0xff]
    %v381 = vld [vmem:[#allocation7 + $0x130] sm:$0xff]
    %v382 = vld [vmem:[#allocation7 + $0x138] sm:$0xff]
    %v383 = vld [vmem:[#allocation7 + $0x140] sm:$0xff]
    %v384 = vld [vmem:[#allocation7 + $0x148] sm:$0xff]
    %v385 = vld [vmem:[#allocation7 + $0x150] sm:$0xff]
    %v386 = vld [vmem:[#allocation7 + $0x158] sm:$0xff]
    %v387 = vld [vmem:[#allocation7 + $0x160] sm:$0xff]
    %v388 = vld [vmem:[#allocation7 + $0x168] sm:$0xff]
    %v389 = vld [vmem:[#allocation7 + $0x170] sm:$0xff]
    %v390 = vld [vmem:[#allocation7 + $0x178] sm:$0xff]
    %v391 = vld [vmem:[#allocation7 + $0x180] sm:$0xff]
    %v392 = vld [vmem:[#allocation7 + $0x188] sm:$0xff]
    %v393 = vld [vmem:[#allocation7 + $0x190] sm:$0xff]
    %v394 = vld [vmem:[#allocation7 + $0x198] sm:$0xff]
    %v395 = vld [vmem:[#allocation7 + $0x1a0] sm:$0xff]
    %v396 = vld [vmem:[#allocation7 + $0x1a8] sm:$0xff]
    %v397 = vld [vmem:[#allocation7 + $0x1b0] sm:$0xff]
    %v398 = vld [vmem:[#allocation7 + $0x1b8] sm:$0xff]
    %v399 = vld [vmem:[#allocation7 + $0x1c0] sm:$0xff]
    %v400 = vld [vmem:[#allocation7 + $0x1c8] sm:$0xff]
    %v401 = vld [vmem:[#allocation7 + $0x1d0] sm:$0xff]
    %v402 = vld [vmem:[#allocation7 + $0x1d8] sm:$0xff]
    %v403 = vld [vmem:[#allocation7 + $0x1e0] sm:$0xff]
    %v404 = vld [vmem:[#allocation7 + $0x1e8] sm:$0xff]
    %v405 = vld [vmem:[#allocation7 + $0x1f0] sm:$0xff]
    %v406 = vld [vmem:[#allocation7 + $0x1f8] sm:$0xff]
    %407 = vmatprep.subr.mxu0 %v374
    %408 = vmatpush1.msra.mxu0 %v373
    %409 = vmatprep.subr.mxu0 %v372
    %410 = vmatpush1.msra.mxu0 %v371
    %411 = vmatprep.subr.mxu0 %v370
    %412 = vmatpush1.msra.mxu0 %v369
    %413 = vmatprep.subr.mxu0 %v368
    %414 = vmatpush1.msra.mxu0 %v367
    %415 = vmatprep.subr.mxu0 %v366
    %416 = vmatpush1.msra.mxu0 %v365
    %417 = vmatprep.subr.mxu0 %v364
    %418 = vmatpush1.msra.mxu0 %v363
    %419 = vmatprep.subr.mxu0 %v362
    %420 = vmatpush1.msra.mxu0 %v361
    %421 = vmatprep.subr.mxu0 %v360
    %422 = vmatpush1.msra.mxu0 %v359
    %423 = vmatprep.subr.mxu0 %v358
    %424 = vmatpush1.msra.mxu0 %v357
    %425 = vmatprep.subr.mxu0 %v356
    %426 = vmatpush1.msra.mxu0 %v355
    %427 = vmatprep.subr.mxu0 %v354
    %428 = vmatpush1.msra.mxu0 %v353
    %429 = vmatprep.subr.mxu0 %v352
    %430 = vmatpush1.msra.mxu0 %v351
    %431 = vmatprep.subr.mxu0 %v350
    %432 = vmatpush1.msra.mxu0 %v349
    %433 = vmatprep.subr.mxu0 %v348
    %434 = vmatpush1.msra.mxu0 %v347
    %435 = vmatprep.subr.mxu0 %v346
    %436 = vmatpush1.msra.mxu0 %v345
    %437 = vmatprep.subr.mxu0 %v344
    %438 = vmatpush1.msra.mxu0 %v343
    %439 = vmatprep.subr.mxu0 %v406
    %440 = vmatpush2.msra.mxu0 %v405
    %441 = vmatprep.subr.mxu0 %v404
    %442 = vmatpush2.msra.mxu0 %v403
    %443 = vmatprep.subr.mxu0 %v402
    %444 = vmatpush2.msra.mxu0 %v401
    %445 = vmatprep.subr.mxu0 %v400
    %446 = vmatpush2.msra.mxu0 %v399
    %447 = vmatprep.subr.mxu0 %v398
    %448 = vmatpush2.msra.mxu0 %v397
    %449 = vmatprep.subr.mxu0 %v396
    %450 = vmatpush2.msra.mxu0 %v395
    %451 = vmatprep.subr.mxu0 %v394
    %452 = vmatpush2.msra.mxu0 %v393
    %453 = vmatprep.subr.mxu0 %v392
    %454 = vmatpush2.msra.mxu0 %v391
    %455 = vmatprep.subr.mxu0 %v390
    %456 = vmatpush2.msra.mxu0 %v389
    %457 = vmatprep.subr.mxu0 %v388
    %458 = vmatpush2.msra.mxu0 %v387
    %459 = vmatprep.subr.mxu0 %v386
    %460 = vmatpush2.msra.mxu0 %v385
    %461 = vmatprep.subr.mxu0 %v384
    %462 = vmatpush2.msra.mxu0 %v383
    %463 = vmatprep.subr.mxu0 %v382
    %464 = vmatpush2.msra.mxu0 %v381
    %465 = vmatprep.subr.mxu0 %v380
    %466 = vmatpush2.msra.mxu0 %v379
    %467 = vmatprep.subr.mxu0 %v378
    %468 = vmatpush2.msra.mxu0 %v377
    %469 = vmatprep.subr.mxu0 %v376
    %470 = vmatpush2.msra.mxu0 %v375
    %471 = vmatprep.mubr.f32.mxu0 %v342
    %472 = vmatmul.mubr.f32.gmra.mxu0 %v341
    %v473 = vpop.f32.mrf.mxu0
    %v474 = vadd.f32 %v253, %v473
    %v475 = vpop.f32.mrf.mxu0
    %v476 = vadd.f32 %v255, %v475
    %477 = vdwg.mxu0
    %v478 = vld [vmem:[%s4] sm:$0x3]
    %v480 = vlaneseq
    %v481 = vshrl.u32 %v480, 7
    %v482 = vsub.s32 0, %v481
    %v483 = vrot.slane %v478, %v482
    %v484 = vlaneseq
    %v485 = vshrl.u32 %v484, 7
    %v486 = vsub.s32 1, %v485
    %v487 = vrot.slane %v478, %v486
    %v490 = vadd.f32 %v474, %v483
    %v491 = vadd.f32 %v476, %v487
    %v492 = vmax.f32 %v490, 0.0
    %v493 = vmax.f32 %v491, 0.0
    %v494 = vld [vmem:[#allocation8] sm:$0xff]
    %v495 = vld [vmem:[#allocation8 + $0x8] sm:$0xff]
    %v496 = vld [vmem:[#allocation8 + $0x10] sm:$0xff]
    %v497 = vld [vmem:[#allocation8 + $0x18] sm:$0xff]
    %v498 = vld [vmem:[#allocation8 + $0x20] sm:$0xff]
    %v499 = vld [vmem:[#allocation8 + $0x28] sm:$0xff]
    %v500 = vld [vmem:[#allocation8 + $0x30] sm:$0xff]
    %v501 = vld [vmem:[#allocation8 + $0x38] sm:$0xff]
    %v502 = vld [vmem:[#allocation8 + $0x40] sm:$0xff]
    %v503 = vld [vmem:[#allocation8 + $0x48] sm:$0xff]
    %v504 = vld [vmem:[#allocation8 + $0x50] sm:$0xff]
    %v505 = vld [vmem:[#allocation8 + $0x58] sm:$0xff]
    %v506 = vld [vmem:[#allocation8 + $0x60] sm:$0xff]
    %v507 = vld [vmem:[#allocation8 + $0x68] sm:$0xff]
    %v508 = vld [vmem:[#allocation8 + $0x70] sm:$0xff]
    %v509 = vld [vmem:[#allocation8 + $0x78] sm:$0xff]
    %v510 = vld [vmem:[#allocation8 + $0x80] sm:$0xff]
    %v511 = vld [vmem:[#allocation8 + $0x88] sm:$0xff]
    %v512 = vld [vmem:[#allocation8 + $0x90] sm:$0xff]
    %v513 = vld [vmem:[#allocation8 + $0x98] sm:$0xff]
    %v514 = vld [vmem:[#allocation8 + $0xa0] sm:$0xff]
    %v515 = vld [vmem:[#allocation8 + $0xa8] sm:$0xff]
    %v516 = vld [vmem:[#allocation8 + $0xb0] sm:$0xff]
    %v517 = vld [vmem:[#allocation8 + $0xb8] sm:$0xff]
    %v518 = vld [vmem:[#allocation8 + $0xc0] sm:$0xff]
    %v519 = vld [vmem:[#allocation8 + $0xc8] sm:$0xff]
    %v520 = vld [vmem:[#allocation8 + $0xd0] sm:$0xff]
    %v521 = vld [vmem:[#allocation8 + $0xd8] sm:$0xff]
    %v522 = vld [vmem:[#allocation8 + $0xe0] sm:$0xff]
    %v523 = vld [vmem:[#allocation8 + $0xe8] sm:$0xff]
    %v524 = vld [vmem:[#allocation8 + $0xf0] sm:$0xff]
    %v525 = vld [vmem:[#allocation8 + $0xf8] sm:$0xff]
    %526 = vmatprep.subr.mxu0 0.0
    %527 = vmatpush1.msra.mxu0 %v509
    %528 = vmatprep.subr.mxu0 0.0
    %529 = vmatpush1.msra.mxu0 %v508
    %530 = vmatprep.subr.mxu0 0.0
    %531 = vmatpush1.msra.mxu0 %v507
    %532 = vmatprep.subr.mxu0 0.0
    %533 = vmatpush1.msra.mxu0 %v506
    %534 = vmatprep.subr.mxu0 0.0
    %535 = vmatpush1.msra.mxu0 %v505
    %536 = vmatprep.subr.mxu0 0.0
    %537 = vmatpush1.msra.mxu0 %v504
    %538 = vmatprep.subr.mxu0 0.0
    %539 = vmatpush1.msra.mxu0 %v503
    %540 = vmatprep.subr.mxu0 0.0
    %541 = vmatpush1.msra.mxu0 %v502
    %542 = vmatprep.subr.mxu0 0.0
    %543 = vmatpush1.msra.mxu0 %v501
    %544 = vmatprep.subr.mxu0 0.0
    %545 = vmatpush1.msra.mxu0 %v500
    %546 = vmatprep.subr.mxu0 0.0
    %547 = vmatpush1.msra.mxu0 %v499
    %548 = vmatprep.subr.mxu0 0.0
    %549 = vmatpush1.msra.mxu0 %v498
    %550 = vmatprep.subr.mxu0 0.0
    %551 = vmatpush1.msra.mxu0 %v497
    %552 = vmatprep.subr.mxu0 0.0
    %553 = vmatpush1.msra.mxu0 %v496
    %554 = vmatprep.subr.mxu0 0.0
    %555 = vmatpush1.msra.mxu0 %v495
    %556 = vmatprep.subr.mxu0 0.0
    %557 = vmatpush1.msra.mxu0 %v494
    %558 = vmatprep.subr.mxu0 0.0
    %559 = vmatpush2.msra.mxu0 %v525
    %560 = vmatprep.subr.mxu0 0.0
    %561 = vmatpush2.msra.mxu0 %v524
    %562 = vmatprep.subr.mxu0 0.0
    %563 = vmatpush2.msra.mxu0 %v523
    %564 = vmatprep.subr.mxu0 0.0
    %565 = vmatpush2.msra.mxu0 %v522
    %566 = vmatprep.subr.mxu0 0.0
    %567 = vmatpush2.msra.mxu0 %v521
    %568 = vmatprep.subr.mxu0 0.0
    %569 = vmatpush2.msra.mxu0 %v520
    %570 = vmatprep.subr.mxu0 0.0
    %571 = vmatpush2.msra.mxu0 %v519
    %572 = vmatprep.subr.mxu0 0.0
    %573 = vmatpush2.msra.mxu0 %v518
    %574 = vmatprep.subr.mxu0 0.0
    %575 = vmatpush2.msra.mxu0 %v517
    %576 = vmatprep.subr.mxu0 0.0
    %577 = vmatpush2.msra.mxu0 %v516
    %578 = vmatprep.subr.mxu0 0.0
    %579 = vmatpush2.msra.mxu0 %v515
    %580 = vmatprep.subr.mxu0 0.0
    %581 = vmatpush2.msra.mxu0 %v514
    %582 = vmatprep.subr.mxu0 0.0
    %583 = vmatpush2.msra.mxu0 %v513
    %584 = vmatprep.subr.mxu0 0.0
    %585 = vmatpush2.msra.mxu0 %v512
    %586 = vmatprep.subr.mxu0 0.0
    %587 = vmatpush2.msra.mxu0 %v511
    %588 = vmatprep.subr.mxu0 0.0
    %589 = vmatpush2.msra.mxu0 %v510
    %590 = vmatprep.mubr.f32.mxu0 %v493
    %591 = vmatmul.mubr.f32.gmra.mxu0 %v492
    %v592 = vpop.f32.mrf.mxu0
    %v593 = vadd.f32 %v324, %v592
    %v594 = vpop.f32.mrf.mxu0
    %595 = vdwg.mxu0
    %v596 = vld [vmem:[%s6] sm:$0x1]
    %v598 = vlaneseq
    %v599 = vshrl.u32 %v598, 7
    %v600 = vsub.s32 0, %v599
    %v601 = vrot.slane %v596, %v600
    %v603 = vadd.f32 %v593, %v601
    %vm604 = vcmask 64512
    %605 = vst.msk [vmem:[#allocation10] sm:$0xff] %vm604, %v603
    // Predicated region
    $region46: #{tpu_custom_call.1} parent=1 // pred_check
      _
    $region47: #{tpu_custom_call.1} parent=1 // pred_check_branch
      %607 = sbr.rel (0) target = $region49
    $region48: #{tpu_custom_call.1} parent=1 // pred_region
      %s609 = ssub.s32 128, 128
      %610 = vsyncadd [#allocation4], %s609
      %s612 = sshll.u32 [#allocation10], 4
      %s613 = int_to_ptr.vmem [resolvable:$true] %s612
      %615 = dma.vmem_to_hbm [thread:$0]  %s613, 128, %s7, [#allocation4]
    $region49: #{tpu_custom_call.1} parent=1 // pred_fallthru
      _
    // Predicated region
    $region50: #{tpu_custom_call.1} parent=1 // pred_check
      _
    $region51: #{tpu_custom_call.1} parent=1 // pred_check_branch
      %617 = sbr.rel (0) target = $region53
    $region52: #{tpu_custom_call.1} parent=1 // pred_region
      %618 = dma.done [#allocation4], 128
    $region53: #{tpu_custom_call.1} parent=1 // pred_fallthru
      _
    %619 = vsyncpa [#allocation3], 1
    %620 = vsyncpa [#allocation6], 1
    %621 = vsyncpa [#allocation9], 1
    %622 = vsyncpa [#allocation4], 1

</llo_original>
